<compile_context>
chip_gen: v5e
topology: v5e:2x2
jax: 0.10.0
libtpu: 0.0.40
codegen_flags: <defaults>
</compile_context>

<pallas_src>
import functools
import math

import jax
import jax.numpy as jnp
from jax.experimental import pallas as pl
from jax.experimental.pallas import tpu as pltpu


_PAD_SENTINEL = 1.0e6            # padded rows -> l1 ~ kd*1e6 -> exp(-l1) == 0
_VMEM_LIMIT = 64 * 1024 * 1024   # <= physical VMEM on v5e/v6e/v7x


def _round_up(x, m):
    return ((x + m - 1) // m) * m


# -----------------------------------------------------------------------------
# Stage 1: projection  M = x @ T   (computed exactly once, tiled over batch)
# -----------------------------------------------------------------------------
def _proj_kernel(x_ref, t_ref, m_ref):
    m_ref[...] = jnp.dot(
        x_ref[...].astype(jnp.float32),
        t_ref[...].astype(jnp.float32),
        preferred_element_type=jnp.float32,
    ).astype(m_ref.dtype)


def _project(xp, T, tile_b, out_dtype):
    Bp, F = xp.shape
    D = T.shape[1]
    return pl.pallas_call(
        _proj_kernel,
        out_shape=jax.ShapeDtypeStruct((Bp, D), out_dtype),
        grid_spec=pltpu.PrefetchScalarGridSpec(
            num_scalar_prefetch=0,
            grid=(Bp // tile_b,),
            in_specs=[
                pl.BlockSpec((tile_b, F), lambda i: (i, 0)),
                pl.BlockSpec((F, D), lambda i: (0, 0)),
            ],
            out_specs=pl.BlockSpec((tile_b, D), lambda i: (i, 0)),
        ),
        compiler_params=pltpu.CompilerParams(
            dimension_semantics=("parallel",),
            vmem_limit_bytes=_VMEM_LIMIT,
        ),
    )(xp, T)


# -----------------------------------------------------------------------------
# Stage 2: tiled pairwise  out[i,c] = sum_j exp(-sum_d |M[i,c,d]-M[j,c,d]|) - 1
# -----------------------------------------------------------------------------
def _pairwise_kernel(mi_ref, mj_ref, sel_ref, out_ref, acc_ref, *, compute_dtype):
    j = pl.program_id(1)

    @pl.when(j == 0)
    def _():
        acc_ref[...] = jnp.zeros_like(acc_ref)

    mi = mi_ref[...].astype(compute_dtype)          # (TI, D), D = nk*kd (lane axis)
    mj = mj_ref[...].astype(compute_dtype)          # (TJ, D)
    ti, d = mi.shape
    tj = mj.shape[0]

    # Lane-dense pairwise |diff| slab: (TI, TJ, D)  -- the dominant VPU work.
    diff = jnp.abs(mi[:, None, :] - mj[None, :, :])

    # Segmented kd-sum on the (otherwise idle) MXU via a block-diagonal 0/1
    # selector (D, NKP); accumulation stays in f32.
    l1 = jnp.dot(
        diff.reshape(ti * tj, d).astype(sel_ref.dtype),
        sel_ref[...],
        preferred_element_type=jnp.float32,
    )                                               # (TI*TJ, NKP), lane-dense

    k = jnp.exp(-l1)                                # EUP, lane-dense
    acc_ref[...] += k.reshape(ti, tj, -1).sum(axis=1)

    @pl.when(j == pl.num_programs(1) - 1)
    def _():
        # exp(0) self-term cancels against the -1; padded j-rows contribute 0.
        out_ref[...] = (acc_ref[...] - 1.0).astype(out_ref.dtype)


def minibatch_discrimination(x, T, num_kernels, kernel_dim, *,
                             compute_dtype=jnp.float32):
    """Pallas-TPU forward of MinibatchDiscrimination (L1 distance kernel)."""
    B, F = x.shape
    D = num_kernels * kernel_dim
    assert T.shape == (F, D), (T.shape, (F, D))

    # 128x128 batch tiles keep the per-step (TI, TJ, D) slab ~8 MiB (D=128),
    # safe on v7x's 64 MiB VMEM; small batches use a single minimal tile.
    tile = min(128, _round_up(max(B, 1), 8))
    Bp = _round_up(B, tile)
    NKP = _round_up(num_kernels, 128)               # lane-dense output slab

    # Pad the batch dimension (zeros; real values installed by the projection).
    xp = x if Bp == B else jnp.pad(x, ((0, Bp - B), (0, 0)))

    # Projection, computed exactly once.  Padded rows become a huge sentinel so
    # exp(-l1) underflows to 0 and they never contribute to the j-sum.
    Mp = _project(xp, T, tile, compute_dtype)
    if Bp != B:
        rows = jnp.arange(Bp, dtype=jnp.int32)[:, None]
        Mp = jnp.where(rows < B, Mp, jnp.asarray(_PAD_SENTINEL, Mp.dtype))

    # Block-diagonal selector: column c sums rows c*kd .. c*kd + kd - 1.
    seg = jnp.arange(D, dtype=jnp.int32) // kernel_dim
    cols = jnp.arange(NKP, dtype=jnp.int32)
    sel = (seg[:, None] == cols[None, :]).astype(compute_dtype)

    grid = (Bp // tile, Bp // tile)
    kernel = functools.partial(_pairwise_kernel, compute_dtype=compute_dtype)
    outp = pl.pallas_call(
        kernel,
        out_shape=jax.ShapeDtypeStruct((Bp, NKP), x.dtype),
        grid_spec=pltpu.PrefetchScalarGridSpec(
            num_scalar_prefetch=0,
            grid=grid,
            in_specs=[
                pl.BlockSpec((tile, D), lambda i, j: (i, 0)),    # M_i tile
                pl.BlockSpec((tile, D), lambda i, j: (j, 0)),    # M_j tile
                pl.BlockSpec((D, NKP), lambda i, j: (0, 0)),     # selector
            ],
            out_specs=pl.BlockSpec((tile, NKP), lambda i, j: (i, 0)),
            scratch_shapes=[pltpu.VMEM((tile, NKP), jnp.float32)],
        ),
        compiler_params=pltpu.CompilerParams(
            dimension_semantics=("parallel", "arbitrary"),
            vmem_limit_bytes=_VMEM_LIMIT,
        ),
    )(Mp, Mp, sel)

    return outp[:B, :num_kernels]


def _reference(x, T, num_kernels, kernel_dim):
    # Pure-JAX reference mirroring the PyTorch forward exactly.
    m = (x @ T).reshape(-1, num_kernels, kernel_dim)
    l1 = jnp.abs(m[None, :, :, :] - m[:, None, :, :]).sum(axis=3)
    k = jnp.exp(-l1)
    return k.sum(axis=1) - 1.0


if __name__ == "__main__":
    B = 8               # batch
    in_features = 32    # x.shape[-1]
    num_kernels = 8
    kernel_dim = 16

    key = jax.random.PRNGKey(0)
    kx, kt = jax.random.split(key)

    # Modest input scale keeps the L1 distances O(1), so exp(-l1) is not
    # vanishingly small and the tolerance check below is meaningful.
    x = 0.25 * jax.random.normal(kx, (B, in_features), dtype=jnp.float32)

    # Deterministic xavier_uniform_-style init for T.
    fan_in, fan_out = in_features, num_kernels * kernel_dim
    bound = math.sqrt(6.0 / (fan_in + fan_out))
    T = jax.random.uniform(
        kt, (in_features, num_kernels * kernel_dim),
        minval=-bound, maxval=bound, dtype=jnp.float32,
    )

    out = minibatch_discrimination(x, T, num_kernels, kernel_dim)
    out = jax.block_until_ready(out)

    ref = _reference(x, T, num_kernels, kernel_dim)
    assert out.shape == (B, num_kernels)
    # Tolerance accounts for MXU default-precision matmuls (bf16-class inputs).
    assert jnp.allclose(out, ref, atol=1e-3, rtol=1e-2), \
        float(jnp.max(jnp.abs(out - ref)))

    print("KERNEL_OK")
</pallas_src>

<mosaic_0001>
module attributes {stable_mosaic.version = 11 : i64} {
  func.func @_proj_kernel(%arg0: i32, %arg1: memref<8x32xf32, #tpu.memory_space<vmem>>, %arg2: memref<32x128xf32, #tpu.memory_space<vmem>>, %arg3: memref<8x128xf32, #tpu.memory_space<vmem>>) attributes {dimension_semantics = [#tpu.dimension_semantics<parallel>], iteration_bounds = array<i64: 1>, scalar_prefetch = 0 : i64, scratch_operands = 0 : i64, tpu.core_type = #tpu.core_type<tc>, window_params = [{transform_indices = @transform_0, window_bounds = array<i64: 8, 32>}, {pipeline_mode = #tpu.pipeline_mode<synchronous>, transform_indices = @transform_1, window_bounds = array<i64: 32, 128>}, {transform_indices = @transform_2, window_bounds = array<i64: 8, 128>}]} {
    %c0 = arith.constant 0 : index
    %c0_0 = arith.constant 0 : index
    %0 = vector.load %arg1[%c0, %c0_0] : memref<8x32xf32, #tpu.memory_space<vmem>>, vector<8x32xf32>
    %c0_1 = arith.constant 0 : index
    %c0_2 = arith.constant 0 : index
    %1 = vector.load %arg2[%c0_1, %c0_2] : memref<32x128xf32, #tpu.memory_space<vmem>>, vector<32x128xf32>
    %cst = arith.constant dense<0.000000e+00> : vector<8x128xf32>
    %2 = tpu.matmul %0, %1, %cst {dimension_numbers = #tpu.dot_dimension_numbers<[1], [0], [0], [1], [0, 0, 1, 1], [], []>} : vector<8x32xf32>, vector<32x128xf32>, vector<8x128xf32> -> vector<8x128xf32>
    %c0_3 = arith.constant 0 : index
    %c0_4 = arith.constant 0 : index
    %3 = vector.load %arg3[%c0_3, %c0_4] : memref<8x128xf32, #tpu.memory_space<vmem>>, vector<8x128xf32>
    tpu.vector_store %arg3[%c0_3, %c0_4], %2 {strides = array<i32>} : memref<8x128xf32, #tpu.memory_space<vmem>>, vector<8x128xf32>,
    return
  }
  func.func @transform_0(%arg0: i32) -> (i32, i32) {
    %c0_i32 = arith.constant 0 : i32
    %c0_i32_0 = arith.constant 0 : i32
    return %arg0, %c0_i32 : i32, i32
  }
  func.func @transform_1(%arg0: i32) -> (i32, i32) {
    %c0_i32 = arith.constant 0 : i32
    %c0_i32_0 = arith.constant 0 : i32
    %c0_i32_1 = arith.constant 0 : i32
    return %c0_i32, %c0_i32_0 : i32, i32
  }
  func.func @transform_2(%arg0: i32) -> (i32, i32) {
    %c0_i32 = arith.constant 0 : i32
    %c0_i32_0 = arith.constant 0 : i32
    return %arg0, %c0_i32 : i32, i32
  }
}

</mosaic_0001>

<llo_original>
// kernel: tpu_custom_call.1
$region0: #{tpu_custom_call.1}
  #allocation0 [shape = 'u32[]', space=smem, size = 0x4, offset = 0x4, fixed_abs, tag = 'smem constant byte address 0x4 - core index']
  #allocation1 [shape = 'u32[72,128]{1,0:T(1,128)}', space=vmem, size = 0x9000, scoped, tag = 'internal scratch']
  %s0 = inlined_call_operand.hbm [shape: f32[8,32], index: 0, kind: input, shape index: {}]
  %s1 = inlined_call_operand.hbm [shape: f32[32,128], index: 1, kind: input, shape index: {}]
  %s2 = inlined_call_operand.hbm [shape: f32[8,128], index: 2, kind: output, shape index: {}]
  %s3 = sld [smem:[#allocation0]]
  $region26: #{tpu_custom_call.1} parent=0
    _
  %s5 = ssub.s32 1, %s3
  %s6 = scalar_select 0, %s5, %s3
  $region1: #{tpu_custom_call.1} parent=0
    #allocation2 [shape = 'u8[4096]{0}', space=vmem, size = 0x1000, scoped, tag = 'input window, operand 0, single buffered']
    #allocation3 [shape = 's32[1]{0}', space=sflag, size = 0x4, scoped, tag = 'scoped memory for tpu_custom_call.1']
    #allocation4 [shape = 's32[1]{0}', space=sflag, size = 0x4, scoped, tag = 'scoped memory for tpu_custom_call.1']
    #allocation5 [shape = 'u8[16384]{0}', space=vmem, size = 0x4000, scoped, tag = 'input window, operand 1, single buffered']
    #allocation6 [shape = 's32[1]{0}', space=sflag, size = 0x4, scoped, tag = 'scoped memory for tpu_custom_call.1']
    #allocation7 [shape = 'u8[4096]{0}', space=vmem, size = 0x1000, scoped, tag = 'output window, operand 0, single buffered']
    %7 = vsyncpa [#allocation3], 0
    %8 = vsyncpa [#allocation6], 0
    %9 = vsyncpa [#allocation4], 0
    // Predicated region
    $region2: #{tpu_custom_call.1} parent=1 // pred_check
      _
    $region3: #{tpu_custom_call.1} parent=1 // pred_check_branch
      %11 = sbr.rel (0) target = $region5
    $region4: #{tpu_custom_call.1} parent=1 // pred_region
      %13 = vsyncadd [#allocation3], 0
      %s15 = sshll.u32 %s0, 4
      %s16 = int_to_ptr.hbm [resolvable:$true] %s15
      %s17 = sshll.u32 [#allocation2], 4
      %s18 = int_to_ptr.vmem [resolvable:$true] %s17
      %20 = dma.hbm_to_vmem [thread:$0]  %s16, 128, %s18, [#allocation3]
    $region5: #{tpu_custom_call.1} parent=1 // pred_fallthru
      _
    // Predicated region
    $region6: #{tpu_custom_call.1} parent=1 // pred_check
      _
    $region7: #{tpu_custom_call.1} parent=1 // pred_check_branch
      %22 = sbr.rel (0) target = $region9
    $region8: #{tpu_custom_call.1} parent=1 // pred_region
      %24 = vsyncadd [#allocation6], 0
      %s25 = sshll.u32 %s1, 4
      %s26 = int_to_ptr.hbm [resolvable:$true] %s25
      %s27 = sshll.u32 [#allocation5], 4
      %s28 = int_to_ptr.vmem [resolvable:$true] %s27
      %33 = dma.hbm_to_vmem [thread:$0]  %s26, 512, %s28, [#allocation6], 128, 128, 8
    $region9: #{tpu_custom_call.1} parent=1 // pred_fallthru
      _
    // Predicated region
    $region10: #{tpu_custom_call.1} parent=1 // pred_check
      _
    $region11: #{tpu_custom_call.1} parent=1 // pred_check_branch
      %35 = sbr.rel (0) target = $region13
    $region12: #{tpu_custom_call.1} parent=1 // pred_region
      %37 = dma.done [#allocation3], 128
    $region13: #{tpu_custom_call.1} parent=1 // pred_fallthru
      _
    // Predicated region
    $region14: #{tpu_custom_call.1} parent=1 // pred_check
      _
    $region15: #{tpu_custom_call.1} parent=1 // pred_check_branch
      %39 = sbr.rel (0) target = $region17
    $region16: #{tpu_custom_call.1} parent=1 // pred_region
      %41 = dma.done [#allocation6], 512
    $region17: #{tpu_custom_call.1} parent=1 // pred_fallthru
      _
    %v42 = vld [vmem:[#allocation2] sm:$0xff]
    %v43 = vld [vmem:[#allocation5] sm:$0xff]
    %v44 = vld [vmem:[#allocation5 + $0x8] sm:$0xff]
    %v45 = vld [vmem:[#allocation5 + $0x10] sm:$0xff]
    %v46 = vld [vmem:[#allocation5 + $0x18] sm:$0xff]
    %vm47 = vcmask 261120
    %v49 = vsel %vm47, %v42, 0
    %51 = vmatpush.msra.mxu0 0.0
    %52 = vmatpush.msra.mxu0 0.0
    %53 = vmatpush.msra.mxu0 0.0
    %54 = vmatpush.msra.mxu0 0.0
    %55 = vmatpush.msra.mxu0 0.0
    %56 = vmatpush.msra.mxu0 0.0
    %57 = vmatpush.msra.mxu0 0.0
    %58 = vmatpush.msra.mxu0 0.0
    %59 = vmatpush.msra.mxu0 0.0
    %60 = vmatpush.msra.mxu0 0.0
    %61 = vmatpush.msra.mxu0 0.0
    %62 = vmatpush.msra.mxu0 0.0
    %63 = vmatpush.msra.mxu0 %v46
    %64 = vmatpush.msra.mxu0 %v45
    %65 = vmatpush.msra.mxu0 %v44
    %66 = vmatpush.msra.mxu0 %v43
    %67 = vmatmul.f32.gmra.mxu0 %v49
    %v68 = vpop.f32.mrf.mxu0
    %v69 = vadd.f32 0.0, %v68
    %70 = vdwg.mxu0
    %71 = vst [vmem:[#allocation7] sm:$0xff] %v69
    // Predicated region
    $region18: #{tpu_custom_call.1} parent=1 // pred_check
      _
    $region19: #{tpu_custom_call.1} parent=1 // pred_check_branch
      %73 = sbr.rel (0) target = $region21
    $region20: #{tpu_custom_call.1} parent=1 // pred_region
      %75 = vsyncadd [#allocation4], 0
      %s77 = sshll.u32 [#allocation7], 4
      %s78 = int_to_ptr.vmem [resolvable:$true] %s77
      %s79 = sshll.u32 %s2, 4
      %s80 = int_to_ptr.hbm [resolvable:$true] %s79
      %82 = dma.vmem_to_hbm [thread:$0]  %s78, 128, %s80, [#allocation4]
    $region21: #{tpu_custom_call.1} parent=1 // pred_fallthru
      _
    // Predicated region
    $region22: #{tpu_custom_call.1} parent=1 // pred_check
      _
    $region23: #{tpu_custom_call.1} parent=1 // pred_check_branch
      %84 = sbr.rel (0) target = $region25
    $region24: #{tpu_custom_call.1} parent=1 // pred_region
      %86 = dma.done [#allocation4], 128
    $region25: #{tpu_custom_call.1} parent=1 // pred_fallthru
      _
    %87 = vsyncpa [#allocation3], 1
    %88 = vsyncpa [#allocation6], 1
    %89 = vsyncpa [#allocation4], 1

</llo_original>
